<compile_context>
chip_gen: v5e
topology: v5e:2x2
jax: 0.10.0
libtpu: 0.0.40
codegen_flags: <defaults>
</compile_context>

<pallas_src>
import functools

import jax
import jax.numpy as jnp
from jax.experimental import pallas as pl
from jax.experimental.pallas import tpu as pltpu


_LANE = 128      # lane (last-dim) tile width
_SUBLANE = 8     # sublane (second-to-last dim) tile height for f32


def _round_up(n, m):
    return ((n + m - 1) // m) * m


def _mlp_fused_kernel(*refs, n_layers):
    """refs = (x, w0, b0, w1, b1, ..., w_{n-1}, b_{n-1}, out).

    Computes  ReLU(x) -> [Linear -> ReLU]*(n_layers-1) -> Linear  on one batch
    tile.  All intermediates live in VMEM/vregs; only the final layer's
    lane-dense (dout padded to 128) output is stored.
    """
    x_ref = refs[0]
    o_ref = refs[1 + 2 * n_layers]

    h = jnp.maximum(x_ref[...], 0.0)              # the module's leading nn.ReLU()
    y = h
    for i in range(n_layers):
        w_ref = refs[1 + 2 * i]                   # (Din[_pad], Dout_pad)
        b_ref = refs[2 + 2 * i]                   # (1, Dout_pad), f32
        y = jnp.dot(h.astype(w_ref.dtype), w_ref[...],
                    preferred_element_type=jnp.float32)
        y = y + b_ref[...]                        # bias broadcast, once per layer
        if i < n_layers - 1:
            h = jnp.maximum(y, 0.0)               # inter-layer ReLU (not after last)
    o_ref[...] = y.astype(o_ref.dtype)


def init_mlp_params(key, hidden_sizes):
    """Deterministic synthetic init matching nn.Linear shapes: W (out, in), b (out,)."""
    params = []
    for i in range(len(hidden_sizes) - 1):
        fan_in, fan_out = hidden_sizes[i], hidden_sizes[i + 1]
        key, kw, kb = jax.random.split(key, 3)
        bound = 1.0 / jnp.sqrt(fan_in)
        w = jax.random.uniform(kw, (fan_out, fan_in), jnp.float32, -bound, bound)
        b = jax.random.uniform(kb, (fan_out,), jnp.float32, -bound, bound)
        params.append((w, b))
    return params


def prepare_params(params, weight_dtype=jnp.float32):
    """One-time prep (hoisted out of the forward path): transpose + zero-pad.

    nn.Linear stores W as (out, in); the kernel wants W_t = (in, out).  Output
    dims are padded to 128 lanes; the FIRST layer's input dim is left unpadded
    so x can be fed without a host-side pad.  Zero padding keeps the math
    exact: padded weight rows/cols and bias lanes are zero, so padded lanes
    stay zero through every ReLU/Linear.

    weight_dtype=jnp.bfloat16 is recommended on v6e/v7x at real hidden sizes
    (halves DMA bytes + VMEM residency, native bf16 MXU); keep f32 on v5e.
    Accumulation stays f32 either way.
    """
    prepped = []
    for idx, (w, b) in enumerate(params):
        dout, din = w.shape
        din_p = din if idx == 0 else _round_up(din, _LANE)
        dout_p = _round_up(dout, _LANE)
        w_t = (jnp.zeros((din_p, dout_p), weight_dtype)
               .at[:din, :dout].set(w.T.astype(weight_dtype)))
        b_p = jnp.zeros((1, dout_p), jnp.float32).at[0, :dout].set(b)
        prepped.append((w_t, b_p))
    return prepped


def _choose_batch_tile(B):
    """Pick a batch tile: full-array block for tiny B, big tiles for large B,
    and >=2 grid steps when the batch can feed both v7x TensorCores."""
    if B <= _SUBLANE:
        return B                                   # single full-dim block, grid=(1,)
    tb = min(1024, _round_up(B, _SUBLANE))
    if B > 2 * _SUBLANE and pl.cdiv(B, tb) < 2:
        tb = _round_up(pl.cdiv(B, 2), _SUBLANE)    # split across 2 TCs (v7x)
    return tb


def mlp_classifier_forward(x, prepped_params):
    """Matches MLP_Classifier.forward:
       ReLU(x) -> Linear -> ReLU -> ... -> Linear (no final ReLU).

    Returns LANE-PADDED logits of shape (B, round_up(out_dim, 128)); the valid
    logits are [:, :out_dim] and padded columns are exactly zero.  Keeping the
    padded buffer avoids an extra XLA slice launch; index it lazily downstream
    (do not softmax over the padded columns).
    """
    B, din = x.shape
    n_layers = len(prepped_params)
    assert prepped_params[0][0].shape[0] == din, "first-layer input dim mismatch"
    dout_p = prepped_params[-1][0].shape[1]

    tb = _choose_batch_tile(B)
    grid_b = pl.cdiv(B, tb)

    inputs = [x]
    in_specs = [pl.BlockSpec((tb, din), lambda i: (i, 0))]
    for (w_t, b) in prepped_params:
        inputs.extend([w_t, b])
        # Weights/biases: block (0, 0) for every batch tile -> fetched once,
        # stay VMEM-resident across the batch grid.
        in_specs.append(pl.BlockSpec(w_t.shape, lambda i: (0, 0)))
        in_specs.append(pl.BlockSpec(b.shape, lambda i: (0, 0)))

    # --- explicit VMEM budget (double-buffering counts even constant-index
    # operands) -> vmem_limit_bytes; keeps the fully-fused template honest on
    # v7x's 64 MiB.  For nets whose 2x weight bytes exceed ~24 MiB, fall back
    # to a per-layer / N-tiled pipeline instead of whole-net residency.
    weight_bytes = sum(w.size * w.dtype.itemsize + b.size * b.dtype.itemsize
                       for (w, b) in prepped_params)
    widths = [din] + [w.shape[1] for (w, _) in prepped_params]
    act_bytes = tb * max(widths) * 4 * len(widths)            # f32 intermediates
    io_tile_bytes = 2 * tb * (din + dout_p) * x.dtype.itemsize  # dbl-buffered x/out
    budget = 2 * weight_bytes + io_tile_bytes + act_bytes + (4 << 20)
    vmem_limit = int(min(max(budget, 32 * 1024 * 1024), 64 * 1024 * 1024))

    flops = 2 * B * sum(w.shape[0] * w.shape[1] for (w, _) in prepped_params)
    bytes_accessed = (x.size * x.dtype.itemsize
                      + weight_bytes
                      + B * dout_p * x.dtype.itemsize)

    kernel = functools.partial(_mlp_fused_kernel, n_layers=n_layers)
    out = pl.pallas_call(
        kernel,
        out_shape=jax.ShapeDtypeStruct((B, dout_p), x.dtype),
        grid=(grid_b,),
        in_specs=in_specs,
        out_specs=pl.BlockSpec((tb, dout_p), lambda i: (i, 0)),
        compiler_params=pltpu.CompilerParams(
            dimension_semantics=("parallel",),
            vmem_limit_bytes=vmem_limit),
        cost_estimate=pl.CostEstimate(flops=flops,
                                      transcendentals=0,
                                      bytes_accessed=bytes_accessed),
    )(*inputs)
    return out


def mlp_classifier_ref(x, params):
    """Plain-JAX reference for correctness check (uses raw nn.Linear-shaped params)."""
    n = len(params)
    h = jnp.maximum(x, 0.0)
    for i, (w, b) in enumerate(params):
        h = h @ w.T + b
        if i < n - 1:
            h = jnp.maximum(h, 0.0)
    return h


if __name__ == "__main__":
    key = jax.random.PRNGKey(0)
    hidden_sizes = [32, 64, 32, 8]   # small MLP: 32 -> 64 -> 32 -> 8
    batch = 2
    out_dim = hidden_sizes[-1]

    kx, kp = jax.random.split(key)
    x = jax.random.normal(kx, (batch, hidden_sizes[0]), jnp.float32)
    params = init_mlp_params(kp, hidden_sizes)
    prepped = prepare_params(params)   # one-time: transpose + pad (not in hot path)

    out_padded = mlp_classifier_forward(x, prepped)
    out_padded = jax.block_until_ready(out_padded)

    ref = mlp_classifier_ref(x, params)
    logits = out_padded[:, :out_dim]           # lazy view into the padded buffer
    assert logits.shape == (batch, out_dim)
    assert jnp.allclose(logits, ref, atol=1e-5, rtol=1e-5)
    # padded logit columns are exactly zero (zero weight/bias padding)
    assert jnp.all(out_padded[:, out_dim:] == 0.0)

    print("KERNEL_OK")
</pallas_src>

<mosaic_0001>
module attributes {stable_mosaic.version = 11 : i64} {
  func.func @_mlp_fused_kernel(%arg0: i32, %arg1: memref<2x32xf32, #tpu.memory_space<vmem>>, %arg2: memref<32x128xf32, #tpu.memory_space<vmem>>, %arg3: memref<1x128xf32, #tpu.memory_space<vmem>>, %arg4: memref<128x128xf32, #tpu.memory_space<vmem>>, %arg5: memref<1x128xf32, #tpu.memory_space<vmem>>, %arg6: memref<128x128xf32, #tpu.memory_space<vmem>>, %arg7: memref<1x128xf32, #tpu.memory_space<vmem>>, %arg8: memref<2x128xf32, #tpu.memory_space<vmem>>) attributes {dimension_semantics = [#tpu.dimension_semantics<parallel>], iteration_bounds = array<i64: 1>, scalar_prefetch = 0 : i64, scratch_operands = 0 : i64, tpu.core_type = #tpu.core_type<tc>, window_params = [{transform_indices = @transform_0, window_bounds = array<i64: 2, 32>}, {pipeline_mode = #tpu.pipeline_mode<synchronous>, transform_indices = @transform_1, window_bounds = array<i64: 32, 128>}, {pipeline_mode = #tpu.pipeline_mode<synchronous>, transform_indices = @transform_2, window_bounds = array<i64: 1, 128>}, {pipeline_mode = #tpu.pipeline_mode<synchronous>, transform_indices = @transform_3, window_bounds = array<i64: 128, 128>}, {pipeline_mode = #tpu.pipeline_mode<synchronous>, transform_indices = @transform_4, window_bounds = array<i64: 1, 128>}, {pipeline_mode = #tpu.pipeline_mode<synchronous>, transform_indices = @transform_5, window_bounds = array<i64: 128, 128>}, {pipeline_mode = #tpu.pipeline_mode<synchronous>, transform_indices = @transform_6, window_bounds = array<i64: 1, 128>}, {transform_indices = @transform_7, window_bounds = array<i64: 2, 128>}]} {
    %c0 = arith.constant 0 : index
    %c0_0 = arith.constant 0 : index
    %0 = vector.load %arg1[%c0, %c0_0] : memref<2x32xf32, #tpu.memory_space<vmem>>, vector<2x32xf32>
    %cst = arith.constant 0.000000e+00 : f32
    %1 = vector.broadcast %cst : f32 to vector<2x32xf32>
    %2 = arith.maximumf %0, %1 : vector<2x32xf32>
    %c0_1 = arith.constant 0 : index
    %c0_2 = arith.constant 0 : index
    %3 = vector.load %arg2[%c0_1, %c0_2] : memref<32x128xf32, #tpu.memory_space<vmem>>, vector<32x128xf32>
    %cst_3 = arith.constant dense<0.000000e+00> : vector<2x128xf32>
    %4 = tpu.matmul %2, %3, %cst_3 {dimension_numbers = #tpu.dot_dimension_numbers<[1], [0], [0], [1], [0, 0, 1, 1], [], []>} : vector<2x32xf32>, vector<32x128xf32>, vector<2x128xf32> -> vector<2x128xf32>
    %c0_4 = arith.constant 0 : index
    %c0_5 = arith.constant 0 : index
    %5 = vector.load %arg3[%c0_4, %c0_5] : memref<1x128xf32, #tpu.memory_space<vmem>>, vector<1x128xf32>
    %6 = vector.broadcast %5 : vector<1x128xf32> to vector<2x128xf32>
    %7 = arith.addf %4, %6 : vector<2x128xf32>
    %cst_6 = arith.constant 0.000000e+00 : f32
    %8 = vector.broadcast %cst_6 : f32 to vector<2x128xf32>
    %9 = arith.maximumf %7, %8 : vector<2x128xf32>
    %c0_7 = arith.constant 0 : index
    %c0_8 = arith.constant 0 : index
    %10 = vector.load %arg4[%c0_7, %c0_8] : memref<128x128xf32, #tpu.memory_space<vmem>>, vector<128x128xf32>
    %cst_9 = arith.constant dense<0.000000e+00> : vector<2x128xf32>
    %11 = tpu.matmul %9, %10, %cst_9 {dimension_numbers = #tpu.dot_dimension_numbers<[1], [0], [0], [1], [0, 0, 1, 1], [], []>} : vector<2x128xf32>, vector<128x128xf32>, vector<2x128xf32> -> vector<2x128xf32>
    %c0_10 = arith.constant 0 : index
    %c0_11 = arith.constant 0 : index
    %12 = vector.load %arg5[%c0_10, %c0_11] : memref<1x128xf32, #tpu.memory_space<vmem>>, vector<1x128xf32>
    %13 = vector.broadcast %12 : vector<1x128xf32> to vector<2x128xf32>
    %14 = arith.addf %11, %13 : vector<2x128xf32>
    %cst_12 = arith.constant 0.000000e+00 : f32
    %15 = vector.broadcast %cst_12 : f32 to vector<2x128xf32>
    %16 = arith.maximumf %14, %15 : vector<2x128xf32>
    %c0_13 = arith.constant 0 : index
    %c0_14 = arith.constant 0 : index
    %17 = vector.load %arg6[%c0_13, %c0_14] : memref<128x128xf32, #tpu.memory_space<vmem>>, vector<128x128xf32>
    %cst_15 = arith.constant dense<0.000000e+00> : vector<2x128xf32>
    %18 = tpu.matmul %16, %17, %cst_15 {dimension_numbers = #tpu.dot_dimension_numbers<[1], [0], [0], [1], [0, 0, 1, 1], [], []>} : vector<2x128xf32>, vector<128x128xf32>, vector<2x128xf32> -> vector<2x128xf32>
    %c0_16 = arith.constant 0 : index
    %c0_17 = arith.constant 0 : index
    %19 = vector.load %arg7[%c0_16, %c0_17] : memref<1x128xf32, #tpu.memory_space<vmem>>, vector<1x128xf32>
    %20 = vector.broadcast %19 : vector<1x128xf32> to vector<2x128xf32>
    %21 = arith.addf %18, %20 : vector<2x128xf32>
    %c0_18 = arith.constant 0 : index
    %c0_19 = arith.constant 0 : index
    %22 = vector.load %arg8[%c0_18, %c0_19] : memref<2x128xf32, #tpu.memory_space<vmem>>, vector<2x128xf32>
    tpu.vector_store %arg8[%c0_18, %c0_19], %21 {strides = array<i32>} : memref<2x128xf32, #tpu.memory_space<vmem>>, vector<2x128xf32>,
    return
  }
  func.func @transform_0(%arg0: i32) -> (i32, i32) {
    %c0_i32 = arith.constant 0 : i32
    %c0_i32_0 = arith.constant 0 : i32
    return %arg0, %c0_i32 : i32, i32
  }
  func.func @transform_1(%arg0: i32) -> (i32, i32) {
    %c0_i32 = arith.constant 0 : i32
    %c0_i32_0 = arith.constant 0 : i32
    %c0_i32_1 = arith.constant 0 : i32
    return %c0_i32, %c0_i32_0 : i32, i32
  }
  func.func @transform_2(%arg0: i32) -> (i32, i32) {
    %c0_i32 = arith.constant 0 : i32
    %c0_i32_0 = arith.constant 0 : i32
    %c0_i32_1 = arith.constant 0 : i32
    return %c0_i32, %c0_i32_0 : i32, i32
  }
  func.func @transform_3(%arg0: i32) -> (i32, i32) {
    %c0_i32 = arith.constant 0 : i32
    %c0_i32_0 = arith.constant 0 : i32
    %c0_i32_1 = arith.constant 0 : i32
    return %c0_i32, %c0_i32_0 : i32, i32
  }
  func.func @transform_4(%arg0: i32) -> (i32, i32) {
    %c0_i32 = arith.constant 0 : i32
    %c0_i32_0 = arith.constant 0 : i32
    %c0_i32_1 = arith.constant 0 : i32
    return %c0_i32, %c0_i32_0 : i32, i32
  }
  func.func @transform_5(%arg0: i32) -> (i32, i32) {
    %c0_i32 = arith.constant 0 : i32
    %c0_i32_0 = arith.constant 0 : i32
    %c0_i32_1 = arith.constant 0 : i32
    return %c0_i32, %c0_i32_0 : i32, i32
  }
  func.func @transform_6(%arg0: i32) -> (i32, i32) {
    %c0_i32 = arith.constant 0 : i32
    %c0_i32_0 = arith.constant 0 : i32
    %c0_i32_1 = arith.constant 0 : i32
    return %c0_i32, %c0_i32_0 : i32, i32
  }
  func.func @transform_7(%arg0: i32) -> (i32, i32) {
    %c0_i32 = arith.constant 0 : i32
    %c0_i32_0 = arith.constant 0 : i32
    return %arg0, %c0_i32 : i32, i32
  }
}

</mosaic_0001>

<llo_original>
// kernel: tpu_custom_call.1
$region0: #{tpu_custom_call.1}
  #allocation0 [shape = 'u32[]', space=smem, size = 0x4, offset = 0x4, fixed_abs, tag = 'smem constant byte address 0x4 - core index']
  #allocation1 [shape = 'u32[72,128]{1,0:T(1,128)}', space=vmem, size = 0x9000, scoped, tag = 'internal scratch']
  %s0 = inlined_call_operand.hbm [shape: f32[2,32], index: 0, kind: input, shape index: {}]
  %s1 = inlined_call_operand.hbm [shape: f32[32,128], index: 1, kind: input, shape index: {}]
  %s2 = inlined_call_operand.vmem [shape: f32[1,128], index: 2, kind: input, shape index: {}]
  %s3 = inlined_call_operand.hbm [shape: f32[128,128], index: 3, kind: input, shape index: {}]
  %s4 = inlined_call_operand.vmem [shape: f32[1,128], index: 4, kind: input, shape index: {}]
  %s5 = inlined_call_operand.hbm [shape: f32[128,128], index: 5, kind: input, shape index: {}]
  %s6 = inlined_call_operand.vmem [shape: f32[1,128], index: 6, kind: input, shape index: {}]
  %s7 = inlined_call_operand.hbm [shape: f32[2,128], index: 7, kind: output, shape index: {}]
  %s8 = sld [smem:[#allocation0]]
  $region54: #{tpu_custom_call.1} parent=0
    _
  %s10 = ssub.s32 1, %s8
  %s11 = scalar_select 0, %s10, %s8
  $region1: #{tpu_custom_call.1} parent=0
    #allocation2 [shape = 'u8[1024]{0}', space=vmem, size = 0x400, scoped, tag = 'input window, operand 0, single buffered']
    #allocation3 [shape = 's32[1]{0}', space=sflag, size = 0x4, scoped, tag = 'scoped memory for tpu_custom_call.1']
    #allocation4 [shape = 's32[1]{0}', space=sflag, size = 0x4, scoped, tag = 'scoped memory for tpu_custom_call.1']
    #allocation5 [shape = 'u8[16384]{0}', space=vmem, size = 0x4000, scoped, tag = 'input window, operand 1, single buffered']
    #allocation6 [shape = 's32[1]{0}', space=sflag, size = 0x4, scoped, tag = 'scoped memory for tpu_custom_call.1']
    #allocation7 [shape = 'u8[65536]{0}', space=vmem, size = 0x10000, scoped, tag = 'input window, operand 3, single buffered']
    #allocation8 [shape = 'u8[65536]{0}', space=vmem, size = 0x10000, scoped, tag = 'input window, operand 5, single buffered']
    #allocation9 [shape = 's32[1]{0}', space=sflag, size = 0x4, scoped, tag = 'scoped memory for tpu_custom_call.1']
    #allocation10 [shape = 'u8[1024]{0}', space=vmem, size = 0x400, scoped, tag = 'output window, operand 0, single buffered']
    %12 = vsyncpa [#allocation3], 0
    %13 = vsyncpa [#allocation6], 0
    %14 = vsyncpa [#allocation9], 0
    %15 = vsyncpa [#allocation4], 0
    // Predicated region
    $region2: #{tpu_custom_call.1} parent=1 // pred_check
      _
    $region3: #{tpu_custom_call.1} parent=1 // pred_check_branch
      %17 = sbr.rel (0) target = $region5
    $region4: #{tpu_custom_call.1} parent=1 // pred_region
      %19 = vsyncadd [#allocation3], 0
      %s21 = sshll.u32 %s0, 4
      %s22 = int_to_ptr.hbm [resolvable:$true] %s21
      %s23 = sshll.u32 [#allocation2], 4
      %s24 = int_to_ptr.vmem [resolvable:$true] %s23
      %26 = dma.hbm_to_vmem [thread:$0]  %s22, 32, %s24, [#allocation3]
    $region5: #{tpu_custom_call.1} parent=1 // pred_fallthru
      _
    // Predicated region
    $region6: #{tpu_custom_call.1} parent=1 // pred_check
      _
    $region7: #{tpu_custom_call.1} parent=1 // pred_check_branch
      %28 = sbr.rel (0) target = $region9
    $region8: #{tpu_custom_call.1} parent=1 // pred_region
      %30 = vsyncadd [#allocation6], 0
      %s31 = sshll.u32 %s1, 4
      %s32 = int_to_ptr.hbm [resolvable:$true] %s31
      %s33 = sshll.u32 [#allocation5], 4
      %s34 = int_to_ptr.vmem [resolvable:$true] %s33
      %39 = dma.hbm_to_vmem [thread:$0]  %s32, 512, %s34, [#allocation6], 128, 128, 8
    $region9: #{tpu_custom_call.1} parent=1 // pred_fallthru
      _
    // Predicated region
    $region10: #{tpu_custom_call.1} parent=1 // pred_check
      _
    $region11: #{tpu_custom_call.1} parent=1 // pred_check_branch
      %41 = sbr.rel (0) target = $region13
    $region12: #{tpu_custom_call.1} parent=1 // pred_region
      _
    $region13: #{tpu_custom_call.1} parent=1 // pred_fallthru
      _
    // Predicated region
    $region14: #{tpu_custom_call.1} parent=1 // pred_check
      _
    $region15: #{tpu_custom_call.1} parent=1 // pred_check_branch
      %43 = sbr.rel (0) target = $region17
    $region16: #{tpu_custom_call.1} parent=1 // pred_region
      %45 = vsyncadd [#allocation6], 0
      %s46 = sshll.u32 %s3, 4
      %s47 = int_to_ptr.hbm [resolvable:$true] %s46
      %s48 = sshll.u32 [#allocation7], 4
      %s49 = int_to_ptr.vmem [resolvable:$true] %s48
      %54 = dma.hbm_to_vmem [thread:$0]  %s47, 2048, %s49, [#allocation6], 128, 128, 8
    $region17: #{tpu_custom_call.1} parent=1 // pred_fallthru
      _
    // Predicated region
    $region18: #{tpu_custom_call.1} parent=1 // pred_check
      _
    $region19: #{tpu_custom_call.1} parent=1 // pred_check_branch
      %56 = sbr.rel (0) target = $region21
    $region20: #{tpu_custom_call.1} parent=1 // pred_region
      _
    $region21: #{tpu_custom_call.1} parent=1 // pred_fallthru
      _
    // Predicated region
    $region22: #{tpu_custom_call.1} parent=1 // pred_check
      _
    $region23: #{tpu_custom_call.1} parent=1 // pred_check_branch
      %58 = sbr.rel (0) target = $region25
    $region24: #{tpu_custom_call.1} parent=1 // pred_region
      %60 = vsyncadd [#allocation9], 0
      %s61 = sshll.u32 %s5, 4
      %s62 = int_to_ptr.hbm [resolvable:$true] %s61
      %s63 = sshll.u32 [#allocation8], 4
      %s64 = int_to_ptr.vmem [resolvable:$true] %s63
      %69 = dma.hbm_to_vmem [thread:$0]  %s62, 2048, %s64, [#allocation9], 128, 128, 8
    $region25: #{tpu_custom_call.1} parent=1 // pred_fallthru
      _
    // Predicated region
    $region26: #{tpu_custom_call.1} parent=1 // pred_check
      _
    $region27: #{tpu_custom_call.1} parent=1 // pred_check_branch
      %71 = sbr.rel (0) target = $region29
    $region28: #{tpu_custom_call.1} parent=1 // pred_region
      _
    $region29: #{tpu_custom_call.1} parent=1 // pred_fallthru
      _
    // Predicated region
    $region30: #{tpu_custom_call.1} parent=1 // pred_check
      _
    $region31: #{tpu_custom_call.1} parent=1 // pred_check_branch
      %73 = sbr.rel (0) target = $region33
    $region32: #{tpu_custom_call.1} parent=1 // pred_region
      %75 = dma.done [#allocation3], 32
    $region33: #{tpu_custom_call.1} parent=1 // pred_fallthru
      _
    // Predicated region
    $region34: #{tpu_custom_call.1} parent=1 // pred_check
      _
    $region35: #{tpu_custom_call.1} parent=1 // pred_check_branch
      %77 = sbr.rel (0) target = $region37
    $region36: #{tpu_custom_call.1} parent=1 // pred_region
      %79 = dma.done [#allocation6], 512
    $region37: #{tpu_custom_call.1} parent=1 // pred_fallthru
      _
    // Predicated region
    $region38: #{tpu_custom_call.1} parent=1 // pred_check
      _
    $region39: #{tpu_custom_call.1} parent=1 // pred_check_branch
      %81 = sbr.rel (0) target = $region41
    $region40: #{tpu_custom_call.1} parent=1 // pred_region
      %83 = dma.done [#allocation6], 2048
    $region41: #{tpu_custom_call.1} parent=1 // pred_fallthru
      _
    // Predicated region
    $region42: #{tpu_custom_call.1} parent=1 // pred_check
      _
    $region43: #{tpu_custom_call.1} parent=1 // pred_check_branch
      %85 = sbr.rel (0) target = $region45
    $region44: #{tpu_custom_call.1} parent=1 // pred_region
      %87 = dma.done [#allocation9], 2048
    $region45: #{tpu_custom_call.1} parent=1 // pred_fallthru
      _
    %v88 = vld [vmem:[#allocation2] sm:$0x3]
    %v89 = vmax.f32 %v88, 0.0
    %v90 = vld [vmem:[#allocation5] sm:$0xff]
    %v91 = vld [vmem:[#allocation5 + $0x8] sm:$0xff]
    %v92 = vld [vmem:[#allocation5 + $0x10] sm:$0xff]
    %v93 = vld [vmem:[#allocation5 + $0x18] sm:$0xff]
    %v94 = vld [vmem:[%s2] sm:$0x1]
    %v96 = vperm.slane %v94, 0
    %vm98 = vcmask 261120
    %v100 = vsel %vm98, %v89, 0
    %102 = vmatpush.msra.mxu0 0.0
    %103 = vmatpush.msra.mxu0 0.0
    %104 = vmatpush.msra.mxu0 0.0
    %105 = vmatpush.msra.mxu0 0.0
    %106 = vmatpush.msra.mxu0 0.0
    %107 = vmatpush.msra.mxu0 0.0
    %108 = vmatpush.msra.mxu0 0.0
    %109 = vmatpush.msra.mxu0 0.0
    %110 = vmatpush.msra.mxu0 0.0
    %111 = vmatpush.msra.mxu0 0.0
    %112 = vmatpush.msra.mxu0 0.0
    %113 = vmatpush.msra.mxu0 0.0
    %114 = vmatpush.msra.mxu0 %v93
    %115 = vmatpush.msra.mxu0 %v92
    %116 = vmatpush.msra.mxu0 %v91
    %117 = vmatpush.msra.mxu0 %v90
    %118 = vmatmul.f32.gmra.mxu0 %v100
    %v119 = vpop.f32.mrf.mxu0
    %v120 = vadd.f32 %v96, %v119
    %121 = vdwg.mxu0
    %v122 = vmax.f32 %v120, 0.0
    %v123 = vld [vmem:[#allocation7] sm:$0xff]
    %v124 = vld [vmem:[#allocation7 + $0x8] sm:$0xff]
    %v125 = vld [vmem:[#allocation7 + $0x10] sm:$0xff]
    %v126 = vld [vmem:[#allocation7 + $0x18] sm:$0xff]
    %v127 = vld [vmem:[#allocation7 + $0x20] sm:$0xff]
    %v128 = vld [vmem:[#allocation7 + $0x28] sm:$0xff]
    %v129 = vld [vmem:[#allocation7 + $0x30] sm:$0xff]
    %v130 = vld [vmem:[#allocation7 + $0x38] sm:$0xff]
    %v131 = vld [vmem:[#allocation7 + $0x40] sm:$0xff]
    %v132 = vld [vmem:[#allocation7 + $0x48] sm:$0xff]
    %v133 = vld [vmem:[#allocation7 + $0x50] sm:$0xff]
    %v134 = vld [vmem:[#allocation7 + $0x58] sm:$0xff]
    %v135 = vld [vmem:[#allocation7 + $0x60] sm:$0xff]
    %v136 = vld [vmem:[#allocation7 + $0x68] sm:$0xff]
    %v137 = vld [vmem:[#allocation7 + $0x70] sm:$0xff]
    %v138 = vld [vmem:[#allocation7 + $0x78] sm:$0xff]
    %v139 = vld [vmem:[%s4] sm:$0x1]
    %v141 = vperm.slane %v139, 0
    %143 = vmatpush.msra.mxu0 %v138
    %144 = vmatpush.msra.mxu0 %v137
    %145 = vmatpush.msra.mxu0 %v136
    %146 = vmatpush.msra.mxu0 %v135
    %147 = vmatpush.msra.mxu0 %v134
    %148 = vmatpush.msra.mxu0 %v133
    %149 = vmatpush.msra.mxu0 %v132
    %150 = vmatpush.msra.mxu0 %v131
    %151 = vmatpush.msra.mxu0 %v130
    %152 = vmatpush.msra.mxu0 %v129
    %153 = vmatpush.msra.mxu0 %v128
    %154 = vmatpush.msra.mxu0 %v127
    %155 = vmatpush.msra.mxu0 %v126
    %156 = vmatpush.msra.mxu0 %v125
    %157 = vmatpush.msra.mxu0 %v124
    %158 = vmatpush.msra.mxu0 %v123
    %159 = vmatmul.f32.gmra.mxu0 %v122
    %v160 = vpop.f32.mrf.mxu0
    %v161 = vadd.f32 %v141, %v160
    %162 = vdwg.mxu0
    %v163 = vmax.f32 %v161, 0.0
    %v164 = vld [vmem:[#allocation8] sm:$0xff]
    %v165 = vld [vmem:[#allocation8 + $0x8] sm:$0xff]
    %v166 = vld [vmem:[#allocation8 + $0x10] sm:$0xff]
    %v167 = vld [vmem:[#allocation8 + $0x18] sm:$0xff]
    %v168 = vld [vmem:[#allocation8 + $0x20] sm:$0xff]
    %v169 = vld [vmem:[#allocation8 + $0x28] sm:$0xff]
    %v170 = vld [vmem:[#allocation8 + $0x30] sm:$0xff]
    %v171 = vld [vmem:[#allocation8 + $0x38] sm:$0xff]
    %v172 = vld [vmem:[#allocation8 + $0x40] sm:$0xff]
    %v173 = vld [vmem:[#allocation8 + $0x48] sm:$0xff]
    %v174 = vld [vmem:[#allocation8 + $0x50] sm:$0xff]
    %v175 = vld [vmem:[#allocation8 + $0x58] sm:$0xff]
    %v176 = vld [vmem:[#allocation8 + $0x60] sm:$0xff]
    %v177 = vld [vmem:[#allocation8 + $0x68] sm:$0xff]
    %v178 = vld [vmem:[#allocation8 + $0x70] sm:$0xff]
    %v179 = vld [vmem:[#allocation8 + $0x78] sm:$0xff]
    %v180 = vld [vmem:[%s6] sm:$0x1]
    %v182 = vperm.slane %v180, 0
    %184 = vmatpush.msra.mxu0 %v179
    %185 = vmatpush.msra.mxu0 %v178
    %186 = vmatpush.msra.mxu0 %v177
    %187 = vmatpush.msra.mxu0 %v176
    %188 = vmatpush.msra.mxu0 %v175
    %189 = vmatpush.msra.mxu0 %v174
    %190 = vmatpush.msra.mxu0 %v173
    %191 = vmatpush.msra.mxu0 %v172
    %192 = vmatpush.msra.mxu0 %v171
    %193 = vmatpush.msra.mxu0 %v170
    %194 = vmatpush.msra.mxu0 %v169
    %195 = vmatpush.msra.mxu0 %v168
    %196 = vmatpush.msra.mxu0 %v167
    %197 = vmatpush.msra.mxu0 %v166
    %198 = vmatpush.msra.mxu0 %v165
    %199 = vmatpush.msra.mxu0 %v164
    %200 = vmatmul.f32.gmra.mxu0 %v163
    %v201 = vpop.f32.mrf.mxu0
    %v202 = vadd.f32 %v182, %v201
    %203 = vdwg.mxu0
    %204 = vst [vmem:[#allocation10] sm:$0x3] %v202
    // Predicated region
    $region46: #{tpu_custom_call.1} parent=1 // pred_check
      _
    $region47: #{tpu_custom_call.1} parent=1 // pred_check_branch
      %206 = sbr.rel (0) target = $region49
    $region48: #{tpu_custom_call.1} parent=1 // pred_region
      %208 = vsyncadd [#allocation4], 0
      %s210 = sshll.u32 [#allocation10], 4
      %s211 = int_to_ptr.vmem [resolvable:$true] %s210
      %s212 = sshll.u32 %s7, 4
      %s213 = int_to_ptr.hbm [resolvable:$true] %s212
      %215 = dma.vmem_to_hbm [thread:$0]  %s211, 32, %s213, [#allocation4]
    $region49: #{tpu_custom_call.1} parent=1 // pred_fallthru
      _
    // Predicated region
    $region50: #{tpu_custom_call.1} parent=1 // pred_check
      _
    $region51: #{tpu_custom_call.1} parent=1 // pred_check_branch
      %217 = sbr.rel (0) target = $region53
    $region52: #{tpu_custom_call.1} parent=1 // pred_region
      %219 = dma.done [#allocation4], 32
    $region53: #{tpu_custom_call.1} parent=1 // pred_fallthru
      _
    %220 = vsyncpa [#allocation3], 1
    %221 = vsyncpa [#allocation6], 1
    %222 = vsyncpa [#allocation9], 1
    %223 = vsyncpa [#allocation4], 1

</llo_original>
